<compile_context>
chip_gen: v6e
topology: v6e:2x2x1
jax: 0.10.0
libtpu: 0.0.40
codegen_flags: <defaults>
</compile_context>

<pallas_src>
import math
import functools

import jax
import jax.numpy as jnp
from jax.experimental import pallas as pl
from jax.experimental.pallas import tpu as pltpu


def _round_up(x, m):
    return ((x + m - 1) // m) * m


def _cdiv(a, b):
    return (a + b - 1) // b


def _sublane_multiple(dtype):
    isz = jnp.dtype(dtype).itemsize
    return {4: 8, 2: 16, 1: 32}.get(isz, 8)


def _vmem_budget_bytes():
    """Generation-aware scoped-VMEM budget (leaves headroom under physical)."""
    cap = None
    try:
        info = pltpu.get_tpu_info()
        cap = getattr(info, "vmem_capacity_bytes", None)
    except Exception:
        cap = None
    if not cap:
        cap = 64 * 1024 * 1024          # conservative default: v7x per-TC VMEM
    if cap >= 100 * 1024 * 1024:        # v5e / v6e: 128 MiB physical
        return 100 * 1024 * 1024
    return 44 * 1024 * 1024             # v7x: 64 MiB physical, leave compiler headroom


def _embed_kernel_resident(x_ref, w_ref, b_ref, o_ref, *, scale):
    # Weight/bias block indices are constant across the (row-tile) grid, so their
    # DMAs are elided after the first fetch; x streams once; output is lane-dense.
    acc = jnp.dot(x_ref[...], w_ref[...], preferred_element_type=jnp.float32)
    o_ref[...] = ((acc + b_ref[...].astype(jnp.float32)) * scale).astype(o_ref.dtype)


def _embed_kernel_ktiled(x_ref, w_ref, b_ref, o_ref, acc_ref, *, scale):
    # Fallback for large F/D: F blocked into tk chunks (innermost "arbitrary" grid
    # axis), f32 accumulator scratch, bias + sqrt(dim_model) epilogue on last step.
    k = pl.program_id(2)

    @pl.when(k == 0)
    def _():
        acc_ref[...] = jnp.zeros_like(acc_ref)

    acc_ref[...] += jnp.dot(x_ref[...], w_ref[...], preferred_element_type=jnp.float32)

    @pl.when(k == pl.num_programs(2) - 1)
    def _():
        o_ref[...] = ((acc_ref[...] + b_ref[...].astype(jnp.float32))
                      * scale).astype(o_ref.dtype)


def feature_embedding(x, weight_t, bias, *, out_dtype=None):
    """FeatureEmbeddingLayer forward: (x @ weight_t + bias) * sqrt(dim_model).

    x: (..., F); weight_t: (F, D) (transpose of PyTorch's (D, F)); bias: (D,).
    Returns (..., D).
    """
    orig_shape = x.shape
    F = orig_shape[-1]
    D = weight_t.shape[1]
    out_dtype = out_dtype if out_dtype is not None else x.dtype

    x2d = x.reshape(-1, F)
    M = x2d.shape[0]
    scale = math.sqrt(D)

    x_isz = jnp.dtype(x.dtype).itemsize
    w_isz = jnp.dtype(weight_t.dtype).itemsize
    o_isz = jnp.dtype(out_dtype).itemsize
    sub = max(_sublane_multiple(x.dtype), _sublane_multiple(out_dtype))

    Dp = _round_up(D, 128)
    budget = _vmem_budget_bytes()
    headroom = 2 * 1024 * 1024

    cost = pl.CostEstimate(
        flops=2 * M * F * D,
        transcendentals=0,
        bytes_accessed=x_isz * M * F + w_isz * F * D + o_isz * M * D,
    )

    def _adapt_tm(tm_target):
        # Ragged-M adaptive row tile: minimize zero-row padding; keep >= 2 row
        # blocks when possible so v7x megacore can shard the M axis.
        nb = max(1, _cdiv(M, tm_target))
        if nb == 1 and M > 2 * sub:
            nb = 2
        tm = _round_up(_cdiv(M, nb), sub)
        nb = _cdiv(M, tm)
        return tm, nb

    # ----- Path A: whole weight + bias resident in VMEM, grid = (row tiles,) -----
    chosen = None
    for tm_target in (2048, 1024, 512, 256, 128, 64, 32, 16, 8):
        if tm_target < sub:
            continue
        tm, nb_m = _adapt_tm(tm_target)
        blk = (2 * (tm * F * x_isz + tm * Dp * o_isz)      # double-buffered x / out
               + 2 * (F * Dp * w_isz + Dp * 4))            # resident weight / bias
        if blk + headroom <= budget:
            chosen = (tm, nb_m)
            break

    if chosen is not None:
        tm, nb_m = chosen
        Mp = tm * nb_m
        if Mp != M:
            x2d = jnp.pad(x2d, ((0, Mp - M), (0, 0)))
        w2d = weight_t
        b2d = bias.reshape(1, D)
        if Dp != D:
            w2d = jnp.pad(w2d, ((0, 0), (0, Dp - D)))
            b2d = jnp.pad(b2d, ((0, 0), (0, Dp - D)))

        out2d = pl.pallas_call(
            functools.partial(_embed_kernel_resident, scale=scale),
            out_shape=jax.ShapeDtypeStruct((Mp, Dp), out_dtype),
            grid_spec=pltpu.PrefetchScalarGridSpec(
                num_scalar_prefetch=0,
                grid=(nb_m,),
                in_specs=[
                    pl.BlockSpec((tm, F), lambda i: (i, 0)),    # x row tile (streamed once)
                    pl.BlockSpec((F, Dp), lambda i: (0, 0)),    # weight: constant -> resident
                    pl.BlockSpec((1, Dp), lambda i: (0, 0)),    # bias: constant -> resident
                ],
                out_specs=pl.BlockSpec((tm, Dp), lambda i: (i, 0)),
            ),
            compiler_params=pltpu.CompilerParams(
                dimension_semantics=("parallel",),
                vmem_limit_bytes=budget,
            ),
            cost_estimate=cost,
        )(x2d, w2d, b2d)
        out2d = out2d[:M, :D]
        return out2d.reshape(*orig_shape[:-1], D)

    # ----- Path C: weight too large for VMEM -> tile D and F with f32 accumulator -
    nb_d = _cdiv(Dp, 512)
    tn = _round_up(_cdiv(Dp, nb_d), 128)
    nb_d = _cdiv(Dp, tn)
    Dp2 = nb_d * tn

    nb_k = _cdiv(F, 512)
    tk = _round_up(_cdiv(F, nb_k), 128)
    nb_k = _cdiv(F, tk)
    Fp = nb_k * tk

    chosen = None
    for tm_target in (1024, 512, 256, 128, 64, 32, 16, 8):
        if tm_target < sub:
            continue
        tm, nb_m = _adapt_tm(tm_target)
        blk = (2 * (tm * tk * x_isz + tk * tn * w_isz + tn * 4 + tm * tn * o_isz)
               + tm * tn * 4)                               # + f32 accumulator scratch
        if blk + headroom <= budget:
            chosen = (tm, nb_m)
            break
    if chosen is None:
        chosen = _adapt_tm(sub)                             # last resort
    tm, nb_m = chosen
    Mp = tm * nb_m

    if Mp != M or Fp != F:
        x2d = jnp.pad(x2d, ((0, Mp - M), (0, Fp - F)))
    w2d = weight_t
    b2d = bias.reshape(1, D)
    if Fp != F or Dp2 != D:
        w2d = jnp.pad(w2d, ((0, Fp - F), (0, Dp2 - D)))
    if Dp2 != D:
        b2d = jnp.pad(b2d, ((0, 0), (0, Dp2 - D)))

    out2d = pl.pallas_call(
        functools.partial(_embed_kernel_ktiled, scale=scale),
        out_shape=jax.ShapeDtypeStruct((Mp, Dp2), out_dtype),
        grid_spec=pltpu.PrefetchScalarGridSpec(
            num_scalar_prefetch=0,
            grid=(nb_m, nb_d, nb_k),          # K innermost: x row block reused across K
            in_specs=[
                pl.BlockSpec((tm, tk), lambda i, j, k: (i, k)),
                pl.BlockSpec((tk, tn), lambda i, j, k: (k, j)),
                pl.BlockSpec((1, tn), lambda i, j, k: (0, j)),
            ],
            out_specs=pl.BlockSpec((tm, tn), lambda i, j, k: (i, j)),
            scratch_shapes=[pltpu.VMEM((tm, tn), jnp.float32)],
        ),
        compiler_params=pltpu.CompilerParams(
            dimension_semantics=("parallel", "parallel", "arbitrary"),
            vmem_limit_bytes=budget,
        ),
        cost_estimate=cost,
    )(x2d, w2d, b2d)
    out2d = out2d[:M, :D]
    return out2d.reshape(*orig_shape[:-1], D)


if __name__ == "__main__":
    # Small shapes consistent with the module's forward: (batch, seq, dim_feature)
    batch, seq, dim_feature, dim_model = 2, 8, 32, 64

    key = jax.random.PRNGKey(0)
    kx, kw, kb = jax.random.split(key, 3)

    x = jax.random.normal(kx, (batch, seq, dim_feature), dtype=jnp.float32)

    # Deterministic nn.Linear-style init: U(-1/sqrt(fan_in), 1/sqrt(fan_in)).
    bound = 1.0 / math.sqrt(dim_feature)
    # PyTorch stores weight as (dim_model, dim_feature); we pass its transpose (F, D).
    weight = jax.random.uniform(kw, (dim_model, dim_feature), jnp.float32, -bound, bound)
    bias = jax.random.uniform(kb, (dim_model,), jnp.float32, -bound, bound)
    weight_t = weight.T  # (F, D)

    out = feature_embedding(x, weight_t, bias)
    out = jax.block_until_ready(out)

    # Reference check against plain JAX (same semantics as the PyTorch forward).
    ref = (x @ weight_t + bias) * math.sqrt(dim_model)
    assert out.shape == (batch, seq, dim_model)
    assert jnp.allclose(out, ref, atol=1e-4, rtol=1e-4)

    print("KERNEL_OK")
</pallas_src>

<mosaic_0001>
module attributes {stable_mosaic.version = 11 : i64} {
  func.func @_embed_kernel_resident(%arg0: i32, %arg1: memref<16x32xf32, #tpu.memory_space<vmem>>, %arg2: memref<32x128xf32, #tpu.memory_space<vmem>>, %arg3: memref<1x128xf32, #tpu.memory_space<vmem>>, %arg4: memref<16x128xf32, #tpu.memory_space<vmem>>) attributes {dimension_semantics = [#tpu.dimension_semantics<parallel>], iteration_bounds = array<i64: 1>, scalar_prefetch = 0 : i64, scratch_operands = 0 : i64, tpu.core_type = #tpu.core_type<tc>, window_params = [{transform_indices = @transform_0, window_bounds = array<i64: 16, 32>}, {pipeline_mode = #tpu.pipeline_mode<synchronous>, transform_indices = @transform_1, window_bounds = array<i64: 32, 128>}, {pipeline_mode = #tpu.pipeline_mode<synchronous>, transform_indices = @transform_2, window_bounds = array<i64: 1, 128>}, {transform_indices = @transform_3, window_bounds = array<i64: 16, 128>}]} {
    %c0 = arith.constant 0 : index
    %c0_0 = arith.constant 0 : index
    %0 = vector.load %arg1[%c0, %c0_0] : memref<16x32xf32, #tpu.memory_space<vmem>>, vector<16x32xf32>
    %c0_1 = arith.constant 0 : index
    %c0_2 = arith.constant 0 : index
    %1 = vector.load %arg2[%c0_1, %c0_2] : memref<32x128xf32, #tpu.memory_space<vmem>>, vector<32x128xf32>
    %cst = arith.constant dense<0.000000e+00> : vector<16x128xf32>
    %2 = tpu.matmul %0, %1, %cst {dimension_numbers = #tpu.dot_dimension_numbers<[1], [0], [0], [1], [0, 0, 1, 1], [], []>} : vector<16x32xf32>, vector<32x128xf32>, vector<16x128xf32> -> vector<16x128xf32>
    %c0_3 = arith.constant 0 : index
    %c0_4 = arith.constant 0 : index
    %3 = vector.load %arg3[%c0_3, %c0_4] : memref<1x128xf32, #tpu.memory_space<vmem>>, vector<1x128xf32>
    %4 = vector.broadcast %3 : vector<1x128xf32> to vector<16x128xf32>
    %5 = arith.addf %2, %4 : vector<16x128xf32>
    %cst_5 = arith.constant 8.000000e+00 : f32
    %6 = vector.broadcast %cst_5 : f32 to vector<16x128xf32>
    %7 = arith.mulf %5, %6 : vector<16x128xf32>
    %c0_6 = arith.constant 0 : index
    %c0_7 = arith.constant 0 : index
    %8 = vector.load %arg4[%c0_6, %c0_7] : memref<16x128xf32, #tpu.memory_space<vmem>>, vector<16x128xf32>
    tpu.vector_store %arg4[%c0_6, %c0_7], %7 {strides = array<i32>} : memref<16x128xf32, #tpu.memory_space<vmem>>, vector<16x128xf32>,
    return
  }
  func.func @transform_0(%arg0: i32) -> (i32, i32) {
    %c0_i32 = arith.constant 0 : i32
    %c0_i32_0 = arith.constant 0 : i32
    return %arg0, %c0_i32 : i32, i32
  }
  func.func @transform_1(%arg0: i32) -> (i32, i32) {
    %c0_i32 = arith.constant 0 : i32
    %c0_i32_0 = arith.constant 0 : i32
    %c0_i32_1 = arith.constant 0 : i32
    return %c0_i32, %c0_i32_0 : i32, i32
  }
  func.func @transform_2(%arg0: i32) -> (i32, i32) {
    %c0_i32 = arith.constant 0 : i32
    %c0_i32_0 = arith.constant 0 : i32
    %c0_i32_1 = arith.constant 0 : i32
    return %c0_i32, %c0_i32_0 : i32, i32
  }
  func.func @transform_3(%arg0: i32) -> (i32, i32) {
    %c0_i32 = arith.constant 0 : i32
    %c0_i32_0 = arith.constant 0 : i32
    return %arg0, %c0_i32 : i32, i32
  }
}

</mosaic_0001>

<llo_original>
// kernel: tpu_custom_call.1
$region0: #{tpu_custom_call.1}
  #allocation0 [shape = 'u32[]', space=smem, size = 0x4, offset = 0x4, fixed_abs, tag = 'smem constant byte address 0x4 - core index']
  #allocation1 [shape = 'u32[144,128]{1,0:T(1,128)}', space=vmem, size = 0x12000, scoped, tag = 'internal scratch']
  %s0 = inlined_call_operand.hbm [shape: f32[16,32], index: 0, kind: input, shape index: {}]
  %s1 = inlined_call_operand.hbm [shape: f32[32,128], index: 1, kind: input, shape index: {}]
  %s2 = inlined_call_operand.vmem [shape: f32[1,128], index: 2, kind: input, shape index: {}]
  %s3 = inlined_call_operand.hbm [shape: f32[16,128], index: 3, kind: output, shape index: {}]
  %s4 = sld [smem:[#allocation0]]
  $region30: #{tpu_custom_call.1} parent=0
    _
  %s6 = ssub.s32 1, %s4
  %s7 = scalar_select 0, %s6, %s4
  $region1: #{tpu_custom_call.1} parent=0
    #allocation2 [shape = 'u8[8192]{0}', space=vmem, size = 0x2000, scoped, tag = 'input window, operand 0, single buffered']
    #allocation3 [shape = 's32[1]{0}', space=sflag, size = 0x4, scoped, tag = 'scoped memory for tpu_custom_call.1']
    #allocation4 [shape = 's32[1]{0}', space=sflag, size = 0x4, scoped, tag = 'scoped memory for tpu_custom_call.1']
    #allocation5 [shape = 'u8[16384]{0}', space=vmem, size = 0x4000, scoped, tag = 'input window, operand 1, single buffered']
    #allocation6 [shape = 's32[1]{0}', space=sflag, size = 0x4, scoped, tag = 'scoped memory for tpu_custom_call.1']
    #allocation7 [shape = 'u8[8192]{0}', space=vmem, size = 0x2000, scoped, tag = 'output window, operand 0, single buffered']
    %8 = vsyncpa [#allocation3], 0
    %9 = vsyncpa [#allocation6], 0
    %10 = vsyncpa [#allocation4], 0
    // Predicated region
    $region2: #{tpu_custom_call.1} parent=1 // pred_check
      _
    $region3: #{tpu_custom_call.1} parent=1 // pred_check_branch
      %12 = sbr.rel (0) target = $region5
    $region4: #{tpu_custom_call.1} parent=1 // pred_region
      %s14 = ssub.s32 256, 256
      %15 = vsyncadd [#allocation3], %s14
      %s16 = sshll.u32 [#allocation2], 4
      %s17 = int_to_ptr.vmem [resolvable:$true] %s16
      %22 = dma.hbm_to_vmem [thread:$0]  %s0, 256, %s17, [#allocation3], 128, 128, 8
    $region5: #{tpu_custom_call.1} parent=1 // pred_fallthru
      _
    // Predicated region
    $region6: #{tpu_custom_call.1} parent=1 // pred_check
      _
    $region7: #{tpu_custom_call.1} parent=1 // pred_check_branch
      %24 = sbr.rel (0) target = $region9
    $region8: #{tpu_custom_call.1} parent=1 // pred_region
      %s26 = ssub.s32 512, 512
      %27 = vsyncadd [#allocation6], %s26
      %s28 = sshll.u32 [#allocation5], 4
      %s29 = int_to_ptr.vmem [resolvable:$true] %s28
      %34 = dma.hbm_to_vmem [thread:$0]  %s1, 512, %s29, [#allocation6], 128, 128, 8
    $region9: #{tpu_custom_call.1} parent=1 // pred_fallthru
      _
    // Predicated region
    $region10: #{tpu_custom_call.1} parent=1 // pred_check
      _
    $region11: #{tpu_custom_call.1} parent=1 // pred_check_branch
      %36 = sbr.rel (0) target = $region13
    $region12: #{tpu_custom_call.1} parent=1 // pred_region
      _
    $region13: #{tpu_custom_call.1} parent=1 // pred_fallthru
      _
    // Predicated region
    $region14: #{tpu_custom_call.1} parent=1 // pred_check
      _
    $region15: #{tpu_custom_call.1} parent=1 // pred_check_branch
      %38 = sbr.rel (0) target = $region17
    $region16: #{tpu_custom_call.1} parent=1 // pred_region
      %39 = dma.done [#allocation3], 256
    $region17: #{tpu_custom_call.1} parent=1 // pred_fallthru
      _
    // Predicated region
    $region18: #{tpu_custom_call.1} parent=1 // pred_check
      _
    $region19: #{tpu_custom_call.1} parent=1 // pred_check_branch
      %41 = sbr.rel (0) target = $region21
    $region20: #{tpu_custom_call.1} parent=1 // pred_region
      %42 = dma.done [#allocation6], 512
    $region21: #{tpu_custom_call.1} parent=1 // pred_fallthru
      _
    %v43 = vld [vmem:[#allocation2] sm:$0xff]
    %v44 = vld [vmem:[#allocation2 + $0x8] sm:$0xff]
    %v45 = vld [vmem:[#allocation5] sm:$0xff]
    %v46 = vld [vmem:[#allocation5 + $0x8] sm:$0xff]
    %v47 = vld [vmem:[#allocation5 + $0x10] sm:$0xff]
    %v48 = vld [vmem:[#allocation5 + $0x18] sm:$0xff]
    %v49 = vld [vmem:[%s2] sm:$0x1]
    %v51 = vlaneseq
    %v52 = vshrl.u32 %v51, 7
    %v53 = vsub.s32 0, %v52
    %v54 = vrot.slane %v49, %v53
    %vm56 = vcmask 261120
    %v58 = vsel %vm56, %v43, 0
    %v61 = vsel %vm56, %v44, 0
    %63 = vmatprep.subr.mxu0 0.0
    %64 = vmatpush1.msra.mxu0 0.0
    %65 = vmatprep.subr.mxu0 0.0
    %66 = vmatpush1.msra.mxu0 0.0
    %67 = vmatprep.subr.mxu0 0.0
    %68 = vmatpush1.msra.mxu0 0.0
    %69 = vmatprep.subr.mxu0 0.0
    %70 = vmatpush1.msra.mxu0 0.0
    %71 = vmatprep.subr.mxu0 0.0
    %72 = vmatpush1.msra.mxu0 0.0
    %73 = vmatprep.subr.mxu0 0.0
    %74 = vmatpush1.msra.mxu0 0.0
    %75 = vmatprep.subr.mxu0 0.0
    %76 = vmatpush1.msra.mxu0 0.0
    %77 = vmatprep.subr.mxu0 0.0
    %78 = vmatpush1.msra.mxu0 0.0
    %79 = vmatprep.subr.mxu0 0.0
    %80 = vmatpush1.msra.mxu0 0.0
    %81 = vmatprep.subr.mxu0 0.0
    %82 = vmatpush1.msra.mxu0 0.0
    %83 = vmatprep.subr.mxu0 0.0
    %84 = vmatpush1.msra.mxu0 0.0
    %85 = vmatprep.subr.mxu0 0.0
    %86 = vmatpush1.msra.mxu0 0.0
    %87 = vmatprep.subr.mxu0 0.0
    %88 = vmatpush1.msra.mxu0 %v48
    %89 = vmatprep.subr.mxu0 0.0
    %90 = vmatpush1.msra.mxu0 %v47
    %91 = vmatprep.subr.mxu0 0.0
    %92 = vmatpush1.msra.mxu0 %v46
    %93 = vmatprep.subr.mxu0 0.0
    %94 = vmatpush1.msra.mxu0 %v45
    %95 = vmatprep.subr.mxu0 0.0
    %96 = vmatpush2.msra.mxu0 0.0
    %97 = vmatprep.subr.mxu0 0.0
    %98 = vmatpush2.msra.mxu0 0.0
    %99 = vmatprep.subr.mxu0 0.0
    %100 = vmatpush2.msra.mxu0 0.0
    %101 = vmatprep.subr.mxu0 0.0
    %102 = vmatpush2.msra.mxu0 0.0
    %103 = vmatprep.subr.mxu0 0.0
    %104 = vmatpush2.msra.mxu0 0.0
    %105 = vmatprep.subr.mxu0 0.0
    %106 = vmatpush2.msra.mxu0 0.0
    %107 = vmatprep.subr.mxu0 0.0
    %108 = vmatpush2.msra.mxu0 0.0
    %109 = vmatprep.subr.mxu0 0.0
    %110 = vmatpush2.msra.mxu0 0.0
    %111 = vmatprep.subr.mxu0 0.0
    %112 = vmatpush2.msra.mxu0 0.0
    %113 = vmatprep.subr.mxu0 0.0
    %114 = vmatpush2.msra.mxu0 0.0
    %115 = vmatprep.subr.mxu0 0.0
    %116 = vmatpush2.msra.mxu0 0.0
    %117 = vmatprep.subr.mxu0 0.0
    %118 = vmatpush2.msra.mxu0 0.0
    %119 = vmatprep.subr.mxu0 0.0
    %120 = vmatpush2.msra.mxu0 0.0
    %121 = vmatprep.subr.mxu0 0.0
    %122 = vmatpush2.msra.mxu0 0.0
    %123 = vmatprep.subr.mxu0 0.0
    %124 = vmatpush2.msra.mxu0 0.0
    %125 = vmatprep.subr.mxu0 0.0
    %126 = vmatpush2.msra.mxu0 0.0
    %127 = vmatprep.mubr.f32.mxu0 0.0
    %128 = vmatmul.mubr.f32.gmra.mxu0 %v58
    %v129 = vpop.f32.mrf.mxu0
    %v130 = vadd.f32 %v54, %v129
    %v131 = vpop.f32.mrf.mxu0
    %132 = vmatprep.mubr.f32.mxu0 0.0
    %133 = vmatmul.mubr.f32.gmra.mxu0 %v61
    %v134 = vpop.f32.mrf.mxu0
    %v135 = vadd.f32 %v54, %v134
    %v136 = vpop.f32.mrf.mxu0
    %137 = vdwg.mxu0
    %v138 = vmul.f32 %v130, 8.0
    %v139 = vmul.f32 %v135, 8.0
    %140 = vst [vmem:[#allocation7] sm:$0xff] %v138
    %141 = vst [vmem:[#allocation7 + $0x8] sm:$0xff] %v139
    // Predicated region
    $region22: #{tpu_custom_call.1} parent=1 // pred_check
      _
    $region23: #{tpu_custom_call.1} parent=1 // pred_check_branch
      %143 = sbr.rel (0) target = $region25
    $region24: #{tpu_custom_call.1} parent=1 // pred_region
      %s145 = ssub.s32 256, 256
      %146 = vsyncadd [#allocation4], %s145
      %s147 = sshll.u32 [#allocation7], 4
      %s148 = int_to_ptr.vmem [resolvable:$true] %s147
      %153 = dma.vmem_to_hbm [thread:$0]  %s148, 256, %s3, [#allocation4], 128, 128, 8
    $region25: #{tpu_custom_call.1} parent=1 // pred_fallthru
      _
    // Predicated region
    $region26: #{tpu_custom_call.1} parent=1 // pred_check
      _
    $region27: #{tpu_custom_call.1} parent=1 // pred_check_branch
      %155 = sbr.rel (0) target = $region29
    $region28: #{tpu_custom_call.1} parent=1 // pred_region
      %156 = dma.done [#allocation4], 256
    $region29: #{tpu_custom_call.1} parent=1 // pred_fallthru
      _
    %157 = vsyncpa [#allocation3], 1
    %158 = vsyncpa [#allocation6], 1
    %159 = vsyncpa [#allocation4], 1

</llo_original>
